<compile_context>
chip_gen: v6e
topology: v6e:2x2x1
jax: 0.10.0
libtpu: 0.0.40
codegen_flags: <defaults>
</compile_context>

<pallas_src>
import functools

import jax
import jax.numpy as jnp
from jax.experimental import pallas as pl
from jax.experimental.pallas import tpu as pltpu

Z_DIM = 64
HIDDEN = 256
EPS = 1e-5
NEG_SLOPE = 0.01
LANE = 128


def _hidden_stats_kernel(x_ref, w1_ref, b1_ref, h_ref, stats_ref):
    """Pass 1: h = LeakyReLU(x @ W1 + b1); accumulate batch sum / sum-of-squares."""
    i = pl.program_id(0)

    @pl.when(i == 0)
    def _():
        stats_ref[...] = jnp.zeros_like(stats_ref)

    h = jnp.dot(x_ref[...].astype(jnp.bfloat16), w1_ref[...],
                preferred_element_type=jnp.float32) + b1_ref[...]
    h = jnp.maximum(h, NEG_SLOPE * h)          # LeakyReLU(0.01): one mul + one max
    h_ref[...] = h

    # Accumulate into the resident (constant-index) output block.
    stats_ref[0:1, :] += jnp.sum(h, axis=0, keepdims=True)
    stats_ref[1:2, :] += jnp.sum(h * h, axis=0, keepdims=True)


def _bn_linear_tanh_kernel(h_ref, stats_ref, gamma_ref, beta_ref,
                           w2_ref, b2_ref, o_ref, *, inv_b):
    """Pass 2: fused BatchNorm (batch stats, biased var) + Linear + Tanh."""
    mean = stats_ref[0:1, :] * inv_b
    var = stats_ref[1:2, :] * inv_b - mean * mean          # biased variance
    scale = gamma_ref[...] * jax.lax.rsqrt(var + EPS)
    shift = beta_ref[...] - mean * scale
    h = h_ref[...] * scale + shift                         # fused normalize+affine
    out = jnp.dot(h.astype(jnp.bfloat16), w2_ref[...],
                  preferred_element_type=jnp.float32) + b2_ref[...]
    o_ref[...] = jnp.tanh(out)


def _pick_tile(batch, tm):
    if tm is not None:
        assert batch % tm == 0, "batch must be divisible by the requested tile"
        return tm
    for cand in (512, 256, 128, 64, 32, 16, 8):
        if batch % cand == 0:
            return cand
    return batch  # tiny / odd batch: single untiled block (full-dim BlockSpec)


def generator_forward(x, params, *, tm=None):
    w1, b1, gamma, beta, w2, b2 = params
    batch, zd = x.shape
    img_dim = w2.shape[1]
    tm = _pick_tile(batch, tm)
    n_tiles = batch // tm

    # MXU-friendly weights (bf16 inputs, f32 accumulate); halves weight DMA bytes.
    w1_bf = w1.astype(jnp.bfloat16)
    w2_bf = w2.astype(jnp.bfloat16)

    # Lane-dense output: pad img_dim up to a multiple of 128, slice afterwards.
    img_pad = ((img_dim + LANE - 1) // LANE) * LANE
    b2p = b2
    if img_pad != img_dim:
        w2_bf = jnp.pad(w2_bf, ((0, 0), (0, img_pad - img_dim)))
        b2p = jnp.pad(b2, ((0, 0), (0, img_pad - img_dim)))

    const = lambda i: (0, 0)   # weights / stats: resident in VMEM across the grid
    row = lambda i: (i, 0)     # activations: tiled along the batch

    # ---- Pass 1: hidden activation + batch statistics (sequential reduction) ----
    h, stats = pl.pallas_call(
        _hidden_stats_kernel,
        out_shape=(jax.ShapeDtypeStruct((batch, HIDDEN), jnp.float32),
                   jax.ShapeDtypeStruct((2, HIDDEN), jnp.float32)),
        grid_spec=pltpu.PrefetchScalarGridSpec(
            num_scalar_prefetch=0,
            grid=(n_tiles,),
            in_specs=[pl.BlockSpec((tm, zd), row),
                      pl.BlockSpec((zd, HIDDEN), const),
                      pl.BlockSpec((1, HIDDEN), const)],
            out_specs=[pl.BlockSpec((tm, HIDDEN), row),
                       pl.BlockSpec((2, HIDDEN), const)]),
        compiler_params=pltpu.CompilerParams(
            dimension_semantics=("arbitrary",)),
        cost_estimate=pl.CostEstimate(
            flops=2 * batch * zd * HIDDEN + 4 * batch * HIDDEN,
            transcendentals=0,
            bytes_accessed=(batch * zd * 4 + zd * HIDDEN * 2 + HIDDEN * 4
                            + batch * HIDDEN * 4 + 2 * HIDDEN * 4)),
    )(x, w1_bf, b1)

    # ---- Pass 2: BatchNorm (fused affine) + Linear + Tanh (parallel on v7x) ----
    out = pl.pallas_call(
        functools.partial(_bn_linear_tanh_kernel, inv_b=1.0 / batch),
        out_shape=jax.ShapeDtypeStruct((batch, img_pad), jnp.float32),
        grid_spec=pltpu.PrefetchScalarGridSpec(
            num_scalar_prefetch=0,
            grid=(n_tiles,),
            in_specs=[pl.BlockSpec((tm, HIDDEN), row),
                      pl.BlockSpec((2, HIDDEN), const),
                      pl.BlockSpec((1, HIDDEN), const),
                      pl.BlockSpec((1, HIDDEN), const),
                      pl.BlockSpec((HIDDEN, img_pad), const),
                      pl.BlockSpec((1, img_pad), const)],
            out_specs=pl.BlockSpec((tm, img_pad), row)),
        compiler_params=pltpu.CompilerParams(
            dimension_semantics=("parallel",)),
        cost_estimate=pl.CostEstimate(
            flops=2 * batch * HIDDEN * img_pad + 3 * batch * HIDDEN,
            transcendentals=batch * img_pad,
            bytes_accessed=(batch * HIDDEN * 4 + 4 * HIDDEN * 4
                            + HIDDEN * img_pad * 2 + img_pad * 4
                            + batch * img_pad * 4)),
    )(h, stats, gamma, beta, w2_bf, b2p)

    if img_pad != img_dim:
        out = out[:, :img_dim]
    return out


def generator_reference(x, params):
    """Pure-JAX f32 reference matching PyTorch training-mode semantics."""
    w1, b1, gamma, beta, w2, b2 = params
    h = x @ w1 + b1
    h = jnp.where(h > 0, h, NEG_SLOPE * h)
    mean = jnp.mean(h, axis=0, keepdims=True)
    var = jnp.mean((h - mean) ** 2, axis=0, keepdims=True)   # biased variance
    h = (h - mean) * jax.lax.rsqrt(var + EPS) * gamma + beta
    return jnp.tanh(h @ w2 + b2)


def init_params(key, z_dim, img_dim):
    """Deterministic init mimicking nn.Linear's uniform(-1/sqrt(fan_in), ...)."""
    k1, k2, k3, k4 = jax.random.split(key, 4)
    bound1 = 1.0 / jnp.sqrt(z_dim)
    w1 = jax.random.uniform(k1, (z_dim, HIDDEN), jnp.float32, -bound1, bound1)
    b1 = jax.random.uniform(k2, (1, HIDDEN), jnp.float32, -bound1, bound1)
    gamma = jnp.ones((1, HIDDEN), jnp.float32)   # BatchNorm1d weight
    beta = jnp.zeros((1, HIDDEN), jnp.float32)   # BatchNorm1d bias
    bound2 = 1.0 / jnp.sqrt(HIDDEN)
    w2 = jax.random.uniform(k3, (HIDDEN, img_dim), jnp.float32, -bound2, bound2)
    b2 = jax.random.uniform(k4, (1, img_dim), jnp.float32, -bound2, bound2)
    return (w1, b1, gamma, beta, w2, b2)


# TODO(synk): BatchNorm1d running-mean/var buffer updates (training-time side
# effect) are not produced; only the forward output (batch-statistics path) is.

if __name__ == "__main__":
    key = jax.random.PRNGKey(0)
    k_param, k_x = jax.random.split(key)

    batch = 512
    img_dim = 784  # MNIST-style; padded to 896 lanes inside the call

    params = init_params(k_param, Z_DIM, img_dim)
    x = jax.random.normal(k_x, (batch, Z_DIM), jnp.float32)

    out = generator_forward(x, params, tm=128)   # grid of 4 batch tiles
    jax.block_until_ready(out)

    assert out.shape == (batch, img_dim)
    assert out.dtype == jnp.float32

    ref = generator_reference(x, params)
    err = float(jnp.max(jnp.abs(out - ref)))
    assert err < 5e-2, f"max abs error vs f32 reference: {err}"
    print("KERNEL_OK")
</pallas_src>

<mosaic_0001>
module attributes {stable_mosaic.version = 11 : i64} {
  func.func @_hidden_stats_kernel(%arg0: i32, %arg1: memref<128x64xf32, #tpu.memory_space<vmem>>, %arg2: memref<64x256xbf16, #tpu.memory_space<vmem>>, %arg3: memref<1x256xf32, #tpu.memory_space<vmem>>, %arg4: memref<128x256xf32, #tpu.memory_space<vmem>>, %arg5: memref<2x256xf32, #tpu.memory_space<vmem>>) attributes {dimension_semantics = [#tpu.dimension_semantics<arbitrary>], iteration_bounds = array<i64: 4>, scalar_prefetch = 0 : i64, scratch_operands = 0 : i64, tpu.core_type = #tpu.core_type<tc>, window_params = [{transform_indices = @transform_0, window_bounds = array<i64: 128, 64>}, {pipeline_mode = #tpu.pipeline_mode<synchronous>, transform_indices = @transform_1, window_bounds = array<i64: 64, 256>}, {pipeline_mode = #tpu.pipeline_mode<synchronous>, transform_indices = @transform_2, window_bounds = array<i64: 1, 256>}, {transform_indices = @transform_3, window_bounds = array<i64: 128, 256>}, {pipeline_mode = #tpu.pipeline_mode<synchronous>, transform_indices = @transform_4, window_bounds = array<i64: 2, 256>}]} {
    %c0_i32 = arith.constant 0 : i32
    %0 = arith.cmpi eq, %arg0, %c0_i32 : i32
    %1 = arith.extui %0 : i1 to i32
    %c0_i32_0 = arith.constant 0 : i32
    %2 = arith.cmpi ne, %1, %c0_i32_0 : i32
    scf.if %2 {
      %cst_18 = arith.constant 0.000000e+00 : f32
      %25 = vector.broadcast %cst_18 : f32 to vector<2x256xf32>
      %c0_19 = arith.constant 0 : index
      %c0_20 = arith.constant 0 : index
      %26 = vector.load %arg5[%c0_19, %c0_20] : memref<2x256xf32, #tpu.memory_space<vmem>>, vector<2x256xf32>
      tpu.vector_store %arg5[%c0_19, %c0_20], %25 {strides = array<i32>} : memref<2x256xf32, #tpu.memory_space<vmem>>, vector<2x256xf32>,
    } else {
    }
    %c0 = arith.constant 0 : index
    %c0_1 = arith.constant 0 : index
    %3 = vector.load %arg1[%c0, %c0_1] : memref<128x64xf32, #tpu.memory_space<vmem>>, vector<128x64xf32>
    %4 = arith.truncf %3 : vector<128x64xf32> to vector<128x64xbf16>
    %c0_2 = arith.constant 0 : index
    %c0_3 = arith.constant 0 : index
    %5 = vector.load %arg2[%c0_2, %c0_3] : memref<64x256xbf16, #tpu.memory_space<vmem>>, vector<64x256xbf16>
    %cst = arith.constant dense<0.000000e+00> : vector<128x256xf32>
    %6 = tpu.matmul %4, %5, %cst {dimension_numbers = #tpu.dot_dimension_numbers<[1], [0], [0], [1], [0, 0, 1, 1], [], []>} : vector<128x64xbf16>, vector<64x256xbf16>, vector<128x256xf32> -> vector<128x256xf32>
    %c0_4 = arith.constant 0 : index
    %c0_5 = arith.constant 0 : index
    %7 = vector.load %arg3[%c0_4, %c0_5] : memref<1x256xf32, #tpu.memory_space<vmem>>, vector<1x256xf32>
    %8 = vector.broadcast %7 : vector<1x256xf32> to vector<128x256xf32>
    %9 = arith.addf %6, %8 : vector<128x256xf32>
    %cst_6 = arith.constant 0.00999999977 : f32
    %10 = vector.broadcast %cst_6 : f32 to vector<128x256xf32>
    %11 = arith.mulf %10, %9 : vector<128x256xf32>
    %12 = arith.maximumf %9, %11 : vector<128x256xf32>
    %c0_7 = arith.constant 0 : index
    %c0_8 = arith.constant 0 : index
    %13 = vector.load %arg4[%c0_7, %c0_8] : memref<128x256xf32, #tpu.memory_space<vmem>>, vector<128x256xf32>
    tpu.vector_store %arg4[%c0_7, %c0_8], %12 {strides = array<i32>} : memref<128x256xf32, #tpu.memory_space<vmem>>, vector<128x256xf32>,
    %c0_9 = arith.constant 0 : index
    %c0_10 = arith.constant 0 : index
    %14 = vector.load %arg5[%c0_9, %c0_10] : memref<2x256xf32, #tpu.memory_space<vmem>>, vector<1x256xf32>
    %cst_11 = arith.constant dense<0.000000e+00> : vector<256xf32>
    %15 = vector.multi_reduction <add>, %12, %cst_11 [0] : vector<128x256xf32> to vector<256xf32>
    %16 = vector.shape_cast %15 : vector<256xf32> to vector<1x256xf32>
    %17 = arith.addf %14, %16 : vector<1x256xf32>
    %c0_12 = arith.constant 0 : index
    %c0_13 = arith.constant 0 : index
    %18 = vector.load %arg5[%c0_12, %c0_13] : memref<2x256xf32, #tpu.memory_space<vmem>>, vector<1x256xf32>
    tpu.vector_store %arg5[%c0_12, %c0_13], %17 {strides = array<i32>} : memref<2x256xf32, #tpu.memory_space<vmem>>, vector<1x256xf32>,
    %c1 = arith.constant 1 : index
    %c0_14 = arith.constant 0 : index
    %19 = vector.load %arg5[%c1, %c0_14] : memref<2x256xf32, #tpu.memory_space<vmem>>, vector<1x256xf32>
    %20 = arith.mulf %12, %12 : vector<128x256xf32>
    %cst_15 = arith.constant dense<0.000000e+00> : vector<256xf32>
    %21 = vector.multi_reduction <add>, %20, %cst_15 [0] : vector<128x256xf32> to vector<256xf32>
    %22 = vector.shape_cast %21 : vector<256xf32> to vector<1x256xf32>
    %23 = arith.addf %19, %22 : vector<1x256xf32>
    %c1_16 = arith.constant 1 : index
    %c0_17 = arith.constant 0 : index
    %24 = vector.load %arg5[%c1_16, %c0_17] : memref<2x256xf32, #tpu.memory_space<vmem>>, vector<1x256xf32>
    tpu.vector_store %arg5[%c1_16, %c0_17], %23 {strides = array<i32>} : memref<2x256xf32, #tpu.memory_space<vmem>>, vector<1x256xf32>,
    return
  }
  func.func @transform_0(%arg0: i32) -> (i32, i32) {
    %c0_i32 = arith.constant 0 : i32
    %c0_i32_0 = arith.constant 0 : i32
    return %arg0, %c0_i32 : i32, i32
  }
  func.func @transform_1(%arg0: i32) -> (i32, i32) {
    %c0_i32 = arith.constant 0 : i32
    %c0_i32_0 = arith.constant 0 : i32
    %c0_i32_1 = arith.constant 0 : i32
    return %c0_i32, %c0_i32_0 : i32, i32
  }
  func.func @transform_2(%arg0: i32) -> (i32, i32) {
    %c0_i32 = arith.constant 0 : i32
    %c0_i32_0 = arith.constant 0 : i32
    %c0_i32_1 = arith.constant 0 : i32
    return %c0_i32, %c0_i32_0 : i32, i32
  }
  func.func @transform_3(%arg0: i32) -> (i32, i32) {
    %c0_i32 = arith.constant 0 : i32
    %c0_i32_0 = arith.constant 0 : i32
    return %arg0, %c0_i32 : i32, i32
  }
  func.func @transform_4(%arg0: i32) -> (i32, i32) {
    %c0_i32 = arith.constant 0 : i32
    %c0_i32_0 = arith.constant 0 : i32
    %c0_i32_1 = arith.constant 0 : i32
    return %c0_i32, %c0_i32_0 : i32, i32
  }
}

</mosaic_0001>

<llo_original>
// kernel: tpu_custom_call.1
$region0: #{tpu_custom_call.1}
  #allocation0 [shape = 'u32[]', space=smem, size = 0x4, offset = 0x4, fixed_abs, tag = 'smem constant byte address 0x4 - core index']
  #allocation1 [shape = 'u32[144,128]{1,0:T(1,128)}', space=vmem, size = 0x12000, scoped, tag = 'internal scratch']
  %s0 = inlined_call_operand.vmem [shape: f32[512,64], index: 0, kind: input, shape index: {}]
  %s1 = inlined_call_operand.vmem [shape: bf16[64,256], index: 1, kind: input, shape index: {}]
  %s2 = inlined_call_operand.vmem [shape: f32[1,256], index: 2, kind: input, shape index: {}]
  %s3 = inlined_call_operand.hbm [shape: f32[512,256], index: 3, kind: output, shape index: {0}]
  %s4 = inlined_call_operand.hbm [shape: f32[2,256], index: 4, kind: output, shape index: {1}]
  %5 = xla_tuple %s3, %s4
  %s6 = sld [smem:[#allocation0]]
  $region57: #{tpu_custom_call.1} parent=0
    _
  %s8 = ssub.s32 1, %s6
  %s9 = scalar_select 0, %s8, %s6
  $region1: #{tpu_custom_call.1} parent=0
    #allocation2 [shape = 'u8[262144]{0}', space=vmem, size = 0x40000, scoped, tag = 'output window, operand 0']
    #allocation3 [shape = 's32[2]{0}', space=sflag, size = 0x8, scoped, tag = 'scoped memory for tpu_custom_call.1']
    #allocation4 [shape = 'u8[2048]{0}', space=vmem, size = 0x800, scoped, tag = 'output window, operand 1, single buffered']
    #allocation5 [shape = 's32[1]{0}', space=sflag, size = 0x4, scoped, tag = 'scoped memory for tpu_custom_call.1']
    %10 = vsyncpa [#allocation3], 0
    %s11 = scalar_lea.sflag [#allocation3], 1
    %12 = vsyncpa %s11, 0
    %13 = vsyncpa [#allocation5], 0
    loop: start=0, step=1, limit=6
    $region2: #{tpu_custom_call.1} parent=1 // loop_pre_header
      _
    $region3: #{tpu_custom_call.1} parent=1 // loop_header
      %s15 = sphi 0, %s19
      %p16 = scmp.ge.s32.totalorder %s15, 6
      %s25 = sphi 0, %s27
      %s28 = sphi 0, %s25
      %s29 = sphi 0, %s28
      %s45 = sphi 0, %s29
      %s49 = sphi 0, %s49
      %s51 = sphi 0, %s49
      %s52 = sphi 0, %s51
      %s66 = sphi 0, %s52
      %s70 = sphi 0, %s70
      %s72 = sphi 0, %s70
      %s73 = sphi 0, %s72
      %s87 = sphi 0, %s73
      %s93 = sphi 0, %s95
      %s96 = sphi 0, %s93
      %s97 = sphi 0, %s96
      %s113 = sphi 0, %s97
      %s117 = sphi 0, %s117
      %s119 = sphi 0, %s117
      %s120 = sphi 0, %s119
      %s134 = sphi 0, %s120
    $region4: #{tpu_custom_call.1} parent=1 // loop_header_branch
      %18 = sbr.rel (%p16) target = $region8
    $region5: #{tpu_custom_call.1} parent=1 // loop_body
      %s20 = ssub.s32 %s15, 1
      %s21 = ssub.s32 %s15, 2
      %s22 = sadd.s32 %s15, 1
      %s23 = ssub.s32 %s15, %s22
      %p24 = scmp.eq.s32.totalorder %s23, 0
      %s26 = sadd.s32 %s25, 1
      %s27 = scalar_select %p24, %s25, %s26
      %p30 = pneg %p24
      %p31 = scmp.eq.s32.totalorder %s15, 3
      %p32 = por %p30, %p31
      %p33 = scmp.ne.s32.totalorder %s25, %s28
      %p34 = scmp.eq.s32.totalorder %s15, 0
      %p35 = por %p33, %p34
      %p36 = scmp.ne.s32.totalorder %s25, %s28
      %p37 = scmp.eq.s32.totalorder %s20, 3
      %p38 = por %p36, %p37
      %p39 = scmp.ne.s32.totalorder %s28, %s29
      %p40 = scmp.eq.s32.totalorder %s20, 0
      %p41 = por %p39, %p40
      %p42 = scmp.ne.s32.totalorder %s28, %s29
      %p43 = scmp.eq.s32.totalorder %s21, 3
      %p44 = por %p42, %p43
      %p46 = scmp.ne.s32.totalorder %s29, %s45
      %p47 = scmp.eq.s32.totalorder %s21, 0
      %p48 = por %p46, %p47
      %s50 = sadd.s32 %s49, 1
      %p53 = scmp.eq.s32.totalorder %s15, 3
      %p54 = scmp.ne.s32.totalorder %s49, %s51
      %p55 = scmp.eq.s32.totalorder %s15, 0
      %p56 = por %p54, %p55
      %p57 = scmp.ne.s32.totalorder %s49, %s51
      %p58 = scmp.eq.s32.totalorder %s20, 3
      %p59 = por %p57, %p58
      %p60 = scmp.ne.s32.totalorder %s51, %s52
      %p61 = scmp.eq.s32.totalorder %s20, 0
      %p62 = por %p60, %p61
      %p63 = scmp.ne.s32.totalorder %s51, %s52
      %p64 = scmp.eq.s32.totalorder %s21, 3
      %p65 = por %p63, %p64
      %p67 = scmp.ne.s32.totalorder %s52, %s66
      %p68 = scmp.eq.s32.totalorder %s21, 0
      %p69 = por %p67, %p68
      %s71 = sadd.s32 %s70, 1
      %p74 = scmp.eq.s32.totalorder %s15, 3
      %p75 = scmp.ne.s32.totalorder %s70, %s72
      %p76 = scmp.eq.s32.totalorder %s15, 0
      %p77 = por %p75, %p76
      %p78 = scmp.ne.s32.totalorder %s70, %s72
      %p79 = scmp.eq.s32.totalorder %s20, 3
      %p80 = por %p78, %p79
      %p81 = scmp.ne.s32.totalorder %s72, %s73
      %p82 = scmp.eq.s32.totalorder %s20, 0
      %p83 = por %p81, %p82
      %p84 = scmp.ne.s32.totalorder %s72, %s73
      %p85 = scmp.eq.s32.totalorder %s21, 3
      %p86 = por %p84, %p85
      %p88 = scmp.ne.s32.totalorder %s73, %s87
      %p89 = scmp.eq.s32.totalorder %s21, 0
      %p90 = por %p88, %p89
      %s91 = ssub.s32 %s15, %s22
      %p92 = scmp.eq.s32.totalorder %s91, 0
      %s94 = sadd.s32 %s93, 1
      %s95 = scalar_select %p92, %s93, %s94
      %p98 = pneg %p92
      %p99 = scmp.eq.s32.totalorder %s15, 3
      %p100 = por %p98, %p99
      %p101 = scmp.ne.s32.totalorder %s93, %s96
      %p102 = scmp.eq.s32.totalorder %s15, 0
      %p103 = por %p101, %p102
      %p104 = scmp.ne.s32.totalorder %s93, %s96
      %p105 = scmp.eq.s32.totalorder %s20, 3
      %p106 = por %p104, %p105
      %p107 = scmp.ne.s32.totalorder %s96, %s97
      %p108 = scmp.eq.s32.totalorder %s20, 0
      %p109 = por %p107, %p108
      %p110 = scmp.ne.s32.totalorder %s96, %s97
      %p111 = scmp.eq.s32.totalorder %s21, 3
      %p112 = por %p110, %p111
      %p114 = scmp.ne.s32.totalorder %s97, %s113
      %p115 = scmp.eq.s32.totalorder %s21, 0
      %p116 = por %p114, %p115
      %s118 = sadd.s32 %s117, 1
      %p121 = scmp.eq.s32.totalorder %s15, 3
      %p122 = scmp.ne.s32.totalorder %s117, %s119
      %p123 = scmp.eq.s32.totalorder %s15, 0
      %p124 = por %p122, %p123
      %p125 = scmp.ne.s32.totalorder %s117, %s119
      %p126 = scmp.eq.s32.totalorder %s20, 3
      %p127 = por %p125, %p126
      %p128 = scmp.ne.s32.totalorder %s119, %s120
      %p129 = scmp.eq.s32.totalorder %s20, 0
      %p130 = por %p128, %p129
      %p131 = scmp.ne.s32.totalorder %s119, %s120
      %p132 = scmp.eq.s32.totalorder %s21, 3
      %p133 = por %p131, %p132
      %p135 = scmp.ne.s32.totalorder %s120, %s134
      %p136 = scmp.eq.s32.totalorder %s21, 0
      %p137 = por %p135, %p136
      %p138 = scmp.le.s32.totalorder 1, %s15
      %p139 = scmp.lt.s32.totalorder %s15, 5
      %p140 = pnand %p138, %p139
      %p141 = pneg %p140
      // Predicated region
      $region9: #{tpu_custom_call.1} parent=5 // pred_check
        _
      $region10: #{tpu_custom_call.1} parent=5 // pred_check_branch
        %143 = sbr.rel (%p140) target = $region12
      $region11: #{tpu_custom_call.1} parent=5 // pred_region
        %s144 = ssub.s32 %s15, 1
        // Predicated region
        $region13: #{tpu_custom_call.1} parent=11 // pred_check
          %p145 = pneg %p62
        $region14: #{tpu_custom_call.1} parent=11 // pred_check_branch
          %147 = sbr.rel (%p145) target = $region16
        $region15: #{tpu_custom_call.1} parent=11 // pred_region
          _
        $region16: #{tpu_custom_call.1} parent=11 // pred_fallthru
          _
        // Predicated region
        $region17: #{tpu_custom_call.1} parent=11 // pred_check
          %p148 = pneg %p83
        $region18: #{tpu_custom_call.1} parent=11 // pred_check_branch
          %150 = sbr.rel (%p148) target = $region20
        $region19: #{tpu_custom_call.1} parent=11 // pred_region
          _
        $region20: #{tpu_custom_call.1} parent=11 // pred_fallthru
          _
      $region12: #{tpu_custom_call.1} parent=5 // pred_fallthru
        _
      %p151 = scmp.lt.s32.totalorder %s15, 4
      // Predicated region
      $region21: #{tpu_custom_call.1} parent=5 // pred_check
        %p152 = pneg %p151
      $region22: #{tpu_custom_call.1} parent=5 // pred_check_branch
        %154 = sbr.rel (%p152) target = $region24
      $region23: #{tpu_custom_call.1} parent=5 // pred_region
        // Predicated region
        $region25: #{tpu_custom_call.1} parent=23 // pred_check
          %p155 = pneg %p35
        $region26: #{tpu_custom_call.1} parent=23 // pred_check_branch
          %157 = sbr.rel (%p155) target = $region28
        $region27: #{tpu_custom_call.1} parent=23 // pred_region
          %s158 = smul.u32 16, %s15
          %p159 = scmp.lt.s32.totalorder %s158, 63
          %s160 = scalar_select %p159, %s158, 63
          %s161 = smul.addr %s160, 8
          %s162 = scalar_lea.vmem %s0, %s161
          %s163 = smul.u32 16, %s15
        $region28: #{tpu_custom_call.1} parent=23 // pred_fallthru
          _
      $region24: #{tpu_custom_call.1} parent=5 // pred_fallthru
        _
      %p164 = scmp.le.s32.totalorder 1, %s15
      %p165 = scmp.lt.s32.totalorder %s15, 5
      %p166 = pnand %p164, %p165
      %p167 = pneg %p166
      // Predicated region
      $region29: #{tpu_custom_call.1} parent=5 // pred_check
        _
      $region30: #{tpu_custom_call.1} parent=5 // pred_check_branch
        %169 = sbr.rel (%p166) target = $region32
      $region31: #{tpu_custom_call.1} parent=5 // pred_region
        %s170 = ssub.s32 %s15, 1
        %s171 = smul.u32 16, %s20
        %p172 = scmp.lt.s32.totalorder %s171, 63
        %s173 = scalar_select %p172, %s171, 63
        %s174 = smul.addr %s173, 8
        %s175 = scalar_lea.vmem %s0, %s174
        %p176 = pneg %p41
        %p177 = pneg %p38
        %p178 = pneg %p62
        %p179 = pneg %p59
        %p180 = pneg %p83
        %p181 = pneg %p80
        %p182 = pneg %p109
        %p183 = pneg %p106
        %s184 = sand.u32 %s96, 1
        %s185 = scalar_lea.sflag [#allocation3], %s184
        %s186 = sand.u32 %s96, 1
        %s187 = smul.addr %s186, 256
        %s188 = scalar_lea.vmem [#allocation2], %s187
        %p189 = pneg %p130
        %p190 = pneg %p127
        %s191 = smul.u32 16, %s20
        %p192 = scmp.lt.s32.totalorder %s191, 63
        %s193 = scalar_select %p192, %s191, 63
        %s194 = smul.addr %s193, 8
        %s195 = scalar_lea.vmem %s0, %s194
        %s196 = smul.u32 16, %s20
        %s197 = smul.u32 16, %s20
        %p199 = scmp.eq.s32.totalorder %s20, 0
        // Predicated region
        $region33: #{tpu_custom_call.1} parent=31 // pred_check
          %p200 = pneg %p199
        $region34: #{tpu_custom_call.1} parent=31 // pred_check_branch
          %202 = sbr.rel (%p200) target = $region36
        $region35: #{tpu_custom_call.1} parent=31 // pred_region
          %203 = vst [vmem:[#allocation4] sm:$0xf] 0.0
        $region36: #{tpu_custom_call.1} parent=31 // pred_fallthru
          _
        %v204 = vld [vmem:[%s195] sm:$0xff]
        %v205 = vld [vmem:[%s195 + $0x8] sm:$0xff]
        %v206 = vld [vmem:[%s195 + $0x10] sm:$0xff]
        %v207 = vld [vmem:[%s195 + $0x18] sm:$0xff]
        %v208 = vld [vmem:[%s195 + $0x20] sm:$0xff]
        %v209 = vld [vmem:[%s195 + $0x28] sm:$0xff]
        %v210 = vld [vmem:[%s195 + $0x30] sm:$0xff]
        %v211 = vld [vmem:[%s195 + $0x38] sm:$0xff]
        %v212 = vld [vmem:[%s195 + $0x40] sm:$0xff]
        %v213 = vld [vmem:[%s195 + $0x48] sm:$0xff]
        %v214 = vld [vmem:[%s195 + $0x50] sm:$0xff]
        %v215 = vld [vmem:[%s195 + $0x58] sm:$0xff]
        %v216 = vld [vmem:[%s195 + $0x60] sm:$0xff]
        %v217 = vld [vmem:[%s195 + $0x68] sm:$0xff]
        %v218 = vld [vmem:[%s195 + $0x70] sm:$0xff]
        %v219 = vld [vmem:[%s195 + $0x78] sm:$0xff]
        %v220 = vpack.c.bf16 %v205, %v204
        %v221 = vpack.c.bf16 %v207, %v206
        %v222 = vpack.c.bf16 %v209, %v208
        %v223 = vpack.c.bf16 %v211, %v210
        %v224 = vpack.c.bf16 %v213, %v212
        %v225 = vpack.c.bf16 %v215, %v214
        %v226 = vpack.c.bf16 %v217, %v216
        %v227 = vpack.c.bf16 %v219, %v218
        %v228 = vld [vmem:[%s1] sm:$0xff]
        %v229 = vld [vmem:[%s1 + $0x8] sm:$0xff]
        %v230 = vld [vmem:[%s1 + $0x10] sm:$0xff]
        %v231 = vld [vmem:[%s1 + $0x18] sm:$0xff]
        %v232 = vld [vmem:[%s1 + $0x20] sm:$0xff]
        %v233 = vld [vmem:[%s1 + $0x28] sm:$0xff]
        %v234 = vld [vmem:[%s1 + $0x30] sm:$0xff]
        %v235 = vld [vmem:[%s1 + $0x38] sm:$0xff]
        %v236 = vld [vmem:[%s2] sm:$0x3]
        %v238 = vlaneseq
        %v239 = vshrl.u32 %v238, 7
        %v240 = vsub.s32 0, %v239
        %v241 = vrot.slane %v236, %v240
        %v242 = vlaneseq
        %v243 = vshrl.u32 %v242, 7
        %v244 = vsub.s32 1, %v243
        %v245 = vrot.slane %v236, %v244
        %v256 = vunpack.c.l.b16 %v228
        %v257 = vunpack.c.h.b16 %v228
        %v258 = vunpack.c.l.b16 %v229
        %v259 = vunpack.c.h.b16 %v229
        %v260 = vunpack.c.l.b16 %v230
        %v261 = vunpack.c.h.b16 %v230
        %v262 = vunpack.c.l.b16 %v231
        %v263 = vunpack.c.h.b16 %v231
        %v264 = vunpack.c.l.b16 %v232
        %v265 = vunpack.c.h.b16 %v232
        %v266 = vunpack.c.l.b16 %v233
        %v267 = vunpack.c.h.b16 %v233
        %v268 = vunpack.c.l.b16 %v234
        %v269 = vunpack.c.h.b16 %v234
        %v270 = vunpack.c.l.b16 %v235
        %v271 = vunpack.c.h.b16 %v235
        %v272 = vpack.c.b16 %v258, %v256
        %v273 = vpack.c.b16 %v259, %v257
        %v274 = vpack.c.b16 %v262, %v260
        %v275 = vpack.c.b16 %v263, %v261
        %v276 = vpack.c.b16 %v266, %v264
        %v277 = vpack.c.b16 %v267, %v265
        %v278 = vpack.c.b16 %v270, %v268
        %v279 = vpack.c.b16 %v271, %v269
        %vm288 = vcmask 523264
        %v290 = vsel %vm288, %v220, 0
        %v293 = vsel %vm288, %v221, 0
        %v296 = vsel %vm288, %v222, 0
        %v299 = vsel %vm288, %v223, 0
        %v302 = vsel %vm288, %v224, 0
        %v305 = vsel %vm288, %v225, 0
        %v308 = vsel %vm288, %v226, 0
        %v311 = vsel %vm288, %v227, 0
        %313 = vmatprep.subr.bf16.mxu0 0
        %314 = vmatpush1.bf16.msra.mxu0 0
        %315 = vmatprep.subr.bf16.mxu0 0
        %316 = vmatpush1.bf16.msra.mxu0 0
        %317 = vmatprep.subr.bf16.mxu0 0
        %318 = vmatpush1.bf16.msra.mxu0 0
        %319 = vmatprep.subr.bf16.mxu0 0
        %320 = vmatpush1.bf16.msra.mxu0 0
        %321 = vmatprep.subr.bf16.mxu0 %v279
        %322 = vmatpush1.bf16.msra.mxu0 %v278
        %323 = vmatprep.subr.bf16.mxu0 %v277
        %324 = vmatpush1.bf16.msra.mxu0 %v276
        %325 = vmatprep.subr.bf16.mxu0 %v275
        %326 = vmatpush1.bf16.msra.mxu0 %v274
        %327 = vmatprep.subr.bf16.mxu0 %v273
        %328 = vmatpush1.bf16.msra.mxu0 %v272
        %329 = vmatprep.subr.bf16.mxu0 0
        %330 = vmatpush2.bf16.msra.mxu0 0
        %331 = vmatprep.subr.bf16.mxu0 0
        %332 = vmatpush2.bf16.msra.mxu0 0
        %333 = vmatprep.subr.bf16.mxu0 0
        %334 = vmatpush2.bf16.msra.mxu0 0
        %335 = vmatprep.subr.bf16.mxu0 0
        %336 = vmatpush2.bf16.msra.mxu0 0
        %337 = vmatprep.subr.bf16.mxu0 0
        %338 = vmatpush2.bf16.msra.mxu0 0
        %339 = vmatprep.subr.bf16.mxu0 0
        %340 = vmatpush2.bf16.msra.mxu0 0
        %341 = vmatprep.subr.bf16.mxu0 0
        %342 = vmatpush2.bf16.msra.mxu0 0
        %343 = vmatprep.subr.bf16.mxu0 0
        %344 = vmatpush2.bf16.msra.mxu0 0
        %345 = vmatprep.mubr.bf16.mxu0 0
        %346 = vmatmul.mubr.bf16.gmra.mxu0 %v290
        %v347 = vpop.f32.mrf.mxu0
        %v348 = vadd.f32 %v241, %v347
        %v349 = vpop.f32.mrf.mxu0
        %v350 = vadd.f32 %v245, %v349
        %v351 = vpop.f32.mrf.mxu0
        %v352 = vadd.f32 %v241, %v351
        %v353 = vpop.f32.mrf.mxu0
        %v354 = vadd.f32 %v245, %v353
        %355 = vmatprep.mubr.bf16.mxu0 0
        %356 = vmatmul.mubr.bf16.gmra.mxu0 %v293
        %v357 = vpop.f32.mrf.mxu0
        %v358 = vadd.f32 %v241, %v357
        %v359 = vpop.f32.mrf.mxu0
        %v360 = vadd.f32 %v245, %v359
        %v361 = vpop.f32.mrf.mxu0
        %v362 = vadd.f32 %v241, %v361
        %v363 = vpop.f32.mrf.mxu0
        %v364 = vadd.f32 %v245, %v363
        %365 = vmatprep.mubr.bf16.mxu0 0
        %366 = vmatmul.mubr.bf16.gmra.mxu0 %v296
        %v367 = vpop.f32.mrf.mxu0
        %v368 = vadd.f32 %v241, %v367
        %v369 = vpop.f32.mrf.mxu0
        %v370 = vadd.f32 %v245, %v369
        %v371 = vpop.f32.mrf.mxu0
        %v372 = vadd.f32 %v241, %v371
        %v373 = vpop.f32.mrf.mxu0
        %v374 = vadd.f32 %v245, %v373
        %375 = vmatprep.mubr.bf16.mxu0 0
        %376 = vmatmul.mubr.bf16.gmra.mxu0 %v299
        %v377 = vpop.f32.mrf.mxu0
        %v378 = vadd.f32 %v241, %v377
        %v379 = vpop.f32.mrf.mxu0
        %v380 = vadd.f32 %v245, %v379
        %v381 = vpop.f32.mrf.mxu0
        %v382 = vadd.f32 %v241, %v381
        %v383 = vpop.f32.mrf.mxu0
        %v384 = vadd.f32 %v245, %v383
        %385 = vmatprep.mubr.bf16.mxu0 0
        %386 = vmatmul.mubr.bf16.gmra.mxu0 %v302
        %v387 = vpop.f32.mrf.mxu0
        %v388 = vadd.f32 %v241, %v387
        %v389 = vpop.f32.mrf.mxu0
        %v390 = vadd.f32 %v245, %v389
        %v391 = vpop.f32.mrf.mxu0
        %v392 = vadd.f32 %v241, %v391
        %v393 = vpop.f32.mrf.mxu0
        %v394 = vadd.f32 %v245, %v393
        %395 = vmatprep.mubr.bf16.mxu0 0
        %396 = vmatmul.mubr.bf16.gmra.mxu0 %v305
        %v397 = vpop.f32.mrf.mxu0
        %v398 = vadd.f32 %v241, %v397
        %v399 = vpop.f32.mrf.mxu0
        %v400 = vadd.f32 %v245, %v399
        %v401 = vpop.f32.mrf.mxu0
        %v402 = vadd.f32 %v241, %v401
        %v403 = vpop.f32.mrf.mxu0
        %v404 = vadd.f32 %v245, %v403
        %405 = vmatprep.mubr.bf16.mxu0 0
        %406 = vmatmul.mubr.bf16.gmra.mxu0 %v308
        %v407 = vpop.f32.mrf.mxu0
        %v408 = vadd.f32 %v241, %v407
        %v409 = vpop.f32.mrf.mxu0
        %v410 = vadd.f32 %v245, %v409
        %v411 = vpop.f32.mrf.mxu0
        %v412 = vadd.f32 %v241, %v411
        %v413 = vpop.f32.mrf.mxu0
        %v414 = vadd.f32 %v245, %v413
        %415 = vmatprep.mubr.bf16.mxu0 0
        %416 = vmatmul.mubr.bf16.gmra.mxu0 %v311
        %v417 = vpop.f32.mrf.mxu0
        %v418 = vadd.f32 %v241, %v417
        %v419 = vpop.f32.mrf.mxu0
        %v420 = vadd.f32 %v245, %v419
        %v421 = vpop.f32.mrf.mxu0
        %v422 = vadd.f32 %v241, %v421
        %v423 = vpop.f32.mrf.mxu0
        %v424 = vadd.f32 %v245, %v423
        %425 = vdwg.mxu0
        %v426 = vmul.f32 %v348, 0.01
        %v427 = vmul.f32 %v350, 0.01
        %v428 = vmul.f32 %v352, 0.01
        %v429 = vmul.f32 %v354, 0.01
        %v430 = vmul.f32 %v358, 0.01
        %v431 = vmul.f32 %v360, 0.01
        %v432 = vmul.f32 %v362, 0.01
        %v433 = vmul.f32 %v364, 0.01
        %v434 = vmul.f32 %v368, 0.01
        %v435 = vmul.f32 %v370, 0.01
        %v436 = vmul.f32 %v372, 0.01
        %v437 = vmul.f32 %v374, 0.01
        %v438 = vmul.f32 %v378, 0.01
        %v439 = vmul.f32 %v380, 0.01
        %v440 = vmul.f32 %v382, 0.01
        %v441 = vmul.f32 %v384, 0.01
        %v442 = vmul.f32 %v388, 0.01
        %v443 = vmul.f32 %v390, 0.01
        %v444 = vmul.f32 %v392, 0.01
        %v445 = vmul.f32 %v394, 0.01
        %v446 = vmul.f32 %v398, 0.01
        %v447 = vmul.f32 %v400, 0.01
        %v448 = vmul.f32 %v402, 0.01
        %v449 = vmul.f32 %v404, 0.01
        %v450 = vmul.f32 %v408, 0.01
        %v451 = vmul.f32 %v410, 0.01
        %v452 = vmul.f32 %v412, 0.01
        %v453 = vmul.f32 %v414, 0.01
        %v454 = vmul.f32 %v418, 0.01
        %v455 = vmul.f32 %v420, 0.01
        %v456 = vmul.f32 %v422, 0.01
        %v457 = vmul.f32 %v424, 0.01
        %v458 = vmax.f32 %v348, %v426
        %v459 = vmax.f32 %v350, %v427
        %v460 = vmax.f32 %v352, %v428
        %v461 = vmax.f32 %v354, %v429
        %v462 = vmax.f32 %v358, %v430
        %v463 = vmax.f32 %v360, %v431
        %v464 = vmax.f32 %v362, %v432
        %v465 = vmax.f32 %v364, %v433
        %v466 = vmax.f32 %v368, %v434
        %v467 = vmax.f32 %v370, %v435
        %v468 = vmax.f32 %v372, %v436
        %v469 = vmax.f32 %v374, %v437
        %v470 = vmax.f32 %v378, %v438
        %v471 = vmax.f32 %v380, %v439
        %v472 = vmax.f32 %v382, %v440
        %v473 = vmax.f32 %v384, %v441
        %v474 = vmax.f32 %v388, %v442
        %v475 = vmax.f32 %v390, %v443
        %v476 = vmax.f32 %v392, %v444
        %v477 = vmax.f32 %v394, %v445
        %v478 = vmax.f32 %v398, %v446
        %v479 = vmax.f32 %v400, %v447
        %v480 = vmax.f32 %v402, %v448
        %v481 = vmax.f32 %v404, %v449
        %v482 = vmax.f32 %v408, %v450
        %v483 = vmax.f32 %v410, %v451
        %v484 = vmax.f32 %v412, %v452
        %v485 = vmax.f32 %v414, %v453
        %v486 = vmax.f32 %v418, %v454
        %v487 = vmax.f32 %v420, %v455
        %v488 = vmax.f32 %v422, %v456
        %v489 = vmax.f32 %v424, %v457
        %490 = vst [vmem:[%s188] sm:$0xff] %v458
        %491 = vst [vmem:[%s188 + $0x8] sm:$0xff] %v459
        %492 = vst [vmem:[%s188 + $0x10] sm:$0xff] %v460
        %493 = vst [vmem:[%s188 + $0x18] sm:$0xff] %v461
        %494 = vst [vmem:[%s188 + $0x20] sm:$0xff] %v462
        %495 = vst [vmem:[%s188 + $0x28] sm:$0xff] %v463
        %496 = vst [vmem:[%s188 + $0x30] sm:$0xff] %v464
        %497 = vst [vmem:[%s188 + $0x38] sm:$0xff] %v465
        %498 = vst [vmem:[%s188 + $0x40] sm:$0xff] %v466
        %499 = vst [vmem:[%s188 + $0x48] sm:$0xff] %v467
        %500 = vst [vmem:[%s188 + $0x50] sm:$0xff] %v468
        %501 = vst [vmem:[%s188 + $0x58] sm:$0xff] %v469
        %502 = vst [vmem:[%s188 + $0x60] sm:$0xff] %v470
        %503 = vst [vmem:[%s188 + $0x68] sm:$0xff] %v471
        %504 = vst [vmem:[%s188 + $0x70] sm:$0xff] %v472
        %505 = vst [vmem:[%s188 + $0x78] sm:$0xff] %v473
        %506 = vst [vmem:[%s188 + $0x80] sm:$0xff] %v474
        %507 = vst [vmem:[%s188 + $0x88] sm:$0xff] %v475
        %508 = vst [vmem:[%s188 + $0x90] sm:$0xff] %v476
        %509 = vst [vmem:[%s188 + $0x98] sm:$0xff] %v477
        %510 = vst [vmem:[%s188 + $0xa0] sm:$0xff] %v478
        %511 = vst [vmem:[%s188 + $0xa8] sm:$0xff] %v479
        %512 = vst [vmem:[%s188 + $0xb0] sm:$0xff] %v480
        %513 = vst [vmem:[%s188 + $0xb8] sm:$0xff] %v481
        %514 = vst [vmem:[%s188 + $0xc0] sm:$0xff] %v482
        %515 = vst [vmem:[%s188 + $0xc8] sm:$0xff] %v483
        %516 = vst [vmem:[%s188 + $0xd0] sm:$0xff] %v484
        %517 = vst [vmem:[%s188 + $0xd8] sm:$0xff] %v485
        %518 = vst [vmem:[%s188 + $0xe0] sm:$0xff] %v486
        %519 = vst [vmem:[%s188 + $0xe8] sm:$0xff] %v487
        %520 = vst [vmem:[%s188 + $0xf0] sm:$0xff] %v488
        %521 = vst [vmem:[%s188 + $0xf8] sm:$0xff] %v489
        %v522 = vld [vmem:[#allocation4] ss:$2 sm:$0x3]
        %v523 = vadd.f32 %v458, %v460
        %v524 = vadd.f32 %v523, %v462
        %v525 = vadd.f32 %v524, %v464
        %v526 = vadd.f32 %v525, %v466
        %v527 = vadd.f32 %v526, %v468
        %v528 = vadd.f32 %v527, %v470
        %v529 = vadd.f32 %v528, %v472
        %v530 = vadd.f32 %v529, %v474
        %v531 = vadd.f32 %v530, %v476
        %v532 = vadd.f32 %v531, %v478
        %v533 = vadd.f32 %v532, %v480
        %v534 = vadd.f32 %v533, %v482
        %v535 = vadd.f32 %v534, %v484
        %v536 = vadd.f32 %v535, %v486
        %v537 = vadd.f32 %v536, %v488
        %v538 = vrot.slane %v537, 4
        %v539 = vadd.f32 %v537, %v538
        %v540 = vrot.slane %v539, 2
        %v541 = vadd.f32 %v539, %v540
        %v542 = vrot.slane %v541, 1
        %v543 = vadd.f32 %v541, %v542
        %v544 = vadd.f32 %v459, %v461
        %v545 = vadd.f32 %v544, %v463
        %v546 = vadd.f32 %v545, %v465
        %v547 = vadd.f32 %v546, %v467
        %v548 = vadd.f32 %v547, %v469
        %v549 = vadd.f32 %v548, %v471
        %v550 = vadd.f32 %v549, %v473
        %v551 = vadd.f32 %v550, %v475
        %v552 = vadd.f32 %v551, %v477
        %v553 = vadd.f32 %v552, %v479
        %v554 = vadd.f32 %v553, %v481
        %v555 = vadd.f32 %v554, %v483
        %v556 = vadd.f32 %v555, %v485
        %v557 = vadd.f32 %v556, %v487
        %v558 = vadd.f32 %v557, %v489
        %v559 = vrot.slane %v558, 4
        %v560 = vadd.f32 %v558, %v559
        %v561 = vrot.slane %v560, 2
        %v562 = vadd.f32 %v560, %v561
        %v563 = vrot.slane %v562, 1
        %v564 = vadd.f32 %v562, %v563
        %v567 = vcombine.low %v543, %v564
        %v569 = vunpack.c.l.s4 1966171168
        %v570 = vunpack.c.0.s8 %v569
        %v571 = vlaneseq
        %v572 = vshrl.u32 %v571, 7
        %v573 = vsub.s32 %v570, %v572
        %v574 = vrot.slane %v567, %v573
        %v576 = vunpack.c.l.s4 1966171168
        %v577 = vunpack.c.0.s8 %v576
        %v578 = vlaneseq
        %v579 = vshrl.u32 %v578, 7
        %v580 = vsub.s32 %v577, %v579
        %v581 = vrot.slane %v574, %v580
        %v583 = vadd.f32 %v522, %v581
        %v584 = vlaneseq
        %vm585 = vcmp.ge.s32.totalorder %v584, 0
        %vm586 = vcmp.lt.s32.totalorder %v584, 256
        %vm587 = vmand %vm585, %vm586
        %588 = vst.msk [vmem:[#allocation4] ss:$2 sm:$0x3] %vm587, %v583
        %s589 = scalar_lea.vmem [#allocation4], 1
        %v590 = vld [vmem:[%s589] ss:$2 sm:$0x3]
        %v591 = vmul.f32 %v458, %v458
        %v592 = vmul.f32 %v459, %v459
        %v593 = vmul.f32 %v460, %v460
        %v594 = vmul.f32 %v461, %v461
        %v595 = vmul.f32 %v462, %v462
        %v596 = vmul.f32 %v463, %v463
        %v597 = vmul.f32 %v464, %v464
        %v598 = vmul.f32 %v465, %v465
        %v599 = vmul.f32 %v466, %v466
        %v600 = vmul.f32 %v467, %v467
        %v601 = vmul.f32 %v468, %v468
        %v602 = vmul.f32 %v469, %v469
        %v603 = vmul.f32 %v470, %v470
        %v604 = vmul.f32 %v471, %v471
        %v605 = vmul.f32 %v472, %v472
        %v606 = vmul.f32 %v473, %v473
        %v607 = vmul.f32 %v474, %v474
        %v608 = vmul.f32 %v475, %v475
        %v609 = vmul.f32 %v476, %v476
        %v610 = vmul.f32 %v477, %v477
        %v611 = vmul.f32 %v478, %v478
        %v612 = vmul.f32 %v479, %v479
        %v613 = vmul.f32 %v480, %v480
        %v614 = vmul.f32 %v481, %v481
        %v615 = vmul.f32 %v482, %v482
        %v616 = vmul.f32 %v483, %v483
        %v617 = vmul.f32 %v484, %v484
        %v618 = vmul.f32 %v485, %v485
        %v619 = vmul.f32 %v486, %v486
        %v620 = vmul.f32 %v487, %v487
        %v621 = vmul.f32 %v488, %v488
        %v622 = vmul.f32 %v489, %v489
        %v623 = vadd.f32 %v591, %v593
        %v624 = vadd.f32 %v623, %v595
        %v625 = vadd.f32 %v624, %v597
        %v626 = vadd.f32 %v625, %v599
        %v627 = vadd.f32 %v626, %v601
        %v628 = vadd.f32 %v627, %v603
        %v629 = vadd.f32 %v628, %v605
        %v630 = vadd.f32 %v629, %v607
        %v631 = vadd.f32 %v630, %v609
        %v632 = vadd.f32 %v631, %v611
        %v633 = vadd.f32 %v632, %v613
        %v634 = vadd.f32 %v633, %v615
        %v635 = vadd.f32 %v634, %v617
        %v636 = vadd.f32 %v635, %v619
        %v637 = vadd.f32 %v636, %v621
        %v638 = vrot.slane %v637, 4
        %v639 = vadd.f32 %v637, %v638
        %v640 = vrot.slane %v639, 2
        %v641 = vadd.f32 %v639, %v640
        %v642 = vrot.slane %v641, 1
        %v643 = vadd.f32 %v641, %v642
        %v644 = vadd.f32 %v592, %v594
        %v645 = vadd.f32 %v644, %v596
        %v646 = vadd.f32 %v645, %v598
        %v647 = vadd.f32 %v646, %v600
        %v648 = vadd.f32 %v647, %v602
        %v649 = vadd.f32 %v648, %v604
        %v650 = vadd.f32 %v649, %v606
        %v651 = vadd.f32 %v650, %v608
        %v652 = vadd.f32 %v651, %v610
        %v653 = vadd.f32 %v652, %v612
        %v654 = vadd.f32 %v653, %v614
        %v655 = vadd.f32 %v654, %v616
        %v656 = vadd.f32 %v655, %v618
        %v657 = vadd.f32 %v656, %v620
        %v658 = vadd.f32 %v657, %v622
        %v659 = vrot.slane %v658, 4
        %v660 = vadd.f32 %v658, %v659
        %v661 = vrot.slane %v660, 2
        %v662 = vadd.f32 %v660, %v661
        %v663 = vrot.slane %v662, 1
        %v664 = vadd.f32 %v662, %v663
        %v667 = vcombine.low %v643, %v664
        %v669 = vunpack.c.l.s4 1966171168
        %v670 = vunpack.c.0.s8 %v669
        %v671 = vlaneseq
        %v672 = vshrl.u32 %v671, 7
        %v673 = vsub.s32 %v670, %v672
        %v674 = vrot.slane %v667, %v673
        %v676 = vunpack.c.l.s4 1966171168
        %v677 = vunpack.c.0.s8 %v676
        %v678 = vlaneseq
        %v679 = vshrl.u32 %v678, 7
        %v680 = vsub.s32 %v677, %v679
        %v681 = vrot.slane %v674, %v680
        %v683 = vadd.f32 %v590, %v681
        %684 = vst.msk [vmem:[%s589] ss:$2 sm:$0x3] %vm587, %v683
        %s685 = sand.u32 %s96, 1
        %s686 = scalar_lea.sflag [#allocation3], %s685
        %s687 = sand.u32 %s96, 1
        %s688 = smul.addr %s687, 256
        %s689 = scalar_lea.vmem [#allocation2], %s688
        // Predicated region
        $region37: #{tpu_custom_call.1} parent=31 // pred_check
          %p690 = pneg %p106
        $region38: #{tpu_custom_call.1} parent=31 // pred_check_branch
          %692 = sbr.rel (%p690) target = $region40
        $region39: #{tpu_custom_call.1} parent=31 // pred_region
          %s693 = smul.u32 16, %s20
          %s695 = ssub.s32 4096, 4096
          %696 = vsyncadd %s686, %s695
          %s697 = smul.addr %s693, 2
          %s698 = smul.addr %s697, 128
          %s699 = scalar_lea.hbm %s3, %s698
          %s700 = sshll.u32 %s689, 4
          %s701 = int_to_ptr.vmem [resolvable:$true] %s700
          %706 = dma.vmem_to_hbm [thread:$0]  %s701, 4096, %s699, %s686, 256, 256, 16
        $region40: #{tpu_custom_call.1} parent=31 // pred_fallthru
          _
        // Predicated region
        $region41: #{tpu_custom_call.1} parent=31 // pred_check
          %p707 = pneg %p127
        $region42: #{tpu_custom_call.1} parent=31 // pred_check_branch
          %709 = sbr.rel (%p707) target = $region44
        $region43: #{tpu_custom_call.1} parent=31 // pred_region
          %s711 = ssub.s32 64, 64
          %712 = vsyncadd [#allocation5], %s711
          %s714 = sshll.u32 [#allocation4], 4
          %s715 = int_to_ptr.vmem [resolvable:$true] %s714
          %717 = dma.vmem_to_hbm [thread:$0]  %s715, 64, %s4, [#allocation5]
        $region44: #{tpu_custom_call.1} parent=31 // pred_fallthru
          _
        // Predicated region
        $region45: #{tpu_custom_call.1} parent=31 // pred_check
          %p718 = pneg %p127
        $region46: #{tpu_custom_call.1} parent=31 // pred_check_branch
          %720 = sbr.rel (%p718) target = $region48
        $region47: #{tpu_custom_call.1} parent=31 // pred_region
          %721 = dma.done [#allocation5], 64
        $region48: #{tpu_custom_call.1} parent=31 // pred_fallthru
          _
      $region32: #{tpu_custom_call.1} parent=5 // pred_fallthru
        _
      %p722 = scmp.le.s32.totalorder 2, %s15
      // Predicated region
      $region49: #{tpu_custom_call.1} parent=5 // pred_check
        %p723 = pneg %p722
      $region50: #{tpu_custom_call.1} parent=5 // pred_check_branch
        %725 = sbr.rel (%p723) target = $region52
      $region51: #{tpu_custom_call.1} parent=5 // pred_region
        %s726 = ssub.s32 %s15, 2
        // Predicated region
        $region53: #{tpu_custom_call.1} parent=51 // pred_check
          %p727 = pneg %p112
        $region54: #{tpu_custom_call.1} parent=51 // pred_check_branch
          %729 = sbr.rel (%p727) target = $region56
        $region55: #{tpu_custom_call.1} parent=51 // pred_region
          %s730 = sand.u32 %s97, 1
          %s731 = scalar_lea.sflag [#allocation3], %s730
          %s732 = sand.u32 %s97, 1
          %s733 = smul.addr %s732, 256
          %s734 = scalar_lea.vmem [#allocation2], %s733
          %735 = dma.done %s731, 4096
        $region56: #{tpu_custom_call.1} parent=51 // pred_fallthru
          _
      $region52: #{tpu_custom_call.1} parent=5 // pred_fallthru
        _
    $region6: #{tpu_custom_call.1} parent=1 // loop_footer
      %s19 = sadd.s32 1, %s15
    $region7: #{tpu_custom_call.1} parent=1 // loop_footer_branch
      %14 = sbr.rel target = $region3
    $region8: #{tpu_custom_call.1} parent=1 // loop_exit
      _
    %736 = vsyncpa [#allocation3], 1
    %s737 = scalar_lea.sflag [#allocation3], 1
    %738 = vsyncpa %s737, 1
    %739 = vsyncpa [#allocation5], 1

</llo_original>
